<compile_context>
chip_gen: v5e
topology: v5e:2x2
jax: 0.10.0
libtpu: 0.0.40
codegen_flags: <defaults>
</compile_context>

<pallas_src>
import jax
import jax.numpy as jnp
from jax.experimental import pallas as pl
from jax.experimental.pallas import tpu as pltpu

_LANE = 128
_TARGET_BLOCK_BYTES = 2 * 1024 * 1024   # ~2 MiB/block -> near HBM roofline
_MAX_BLOCK_BYTES = 2 * 1024 * 1024      # 2 in + 2 out bufs <= 8 MiB everywhere


def _identity_kernel(x_ref, o_ref):
    # Pure copy: o = x (identity projection).
    o_ref[...] = x_ref[...]


def _largest_divisor_le(n: int, cap: int, multiple: int) -> int:
    """Largest d with d | n, d <= cap and d % multiple == 0 (0 if none)."""
    best = 0
    d = 1
    while d * d <= n:
        if n % d == 0:
            for c in (d, n // d):
                if c <= cap and c % multiple == 0 and c > best:
                    best = c
        d += 1
    return best


def _choose_layout(shape, itemsize):
    """Pick a lane-dense (rows, width) view plus a row tile and grid length."""
    total = 1
    for d in shape:
        total *= d
    hidden = shape[-1]

    # Lane-dense slab: width a multiple of 128 so every vreg lane is used and
    # stores are unmasked. Fall back to the raw feature dim if 128 does not
    # divide the total element count (block == full dim is still legal).
    width = 0
    if total % _LANE == 0:
        for w in (2048, 1024, 512, 256, _LANE):
            if total % w == 0:
                width = w
                break
    if width == 0:
        width = hidden
    rows = total // width

    # Sublane packing per dtype: f32 -> 8, bf16 -> 16, int8/fp8 -> 32.
    sub = max(8, 32 // max(1, itemsize))
    row_bytes = width * itemsize
    cap_rows = max(1, _MAX_BLOCK_BYTES // row_bytes)
    target_rows = max(1, min(_TARGET_BLOCK_BYTES // row_bytes, cap_rows, rows))

    tile_r = _largest_divisor_le(rows, target_rows, sub)
    if tile_r == 0:
        if rows <= cap_rows:
            # Full row extent: always a legal block shape and fits the cap.
            tile_r = rows
        else:
            # Sublane-aligned, non-dividing tile; Pallas clips the last block.
            tile_r = max(sub, (target_rows // sub) * sub)

    grid = pl.cdiv(rows, tile_r)
    return rows, width, tile_r, grid


def identity_projection(x: jax.Array) -> jax.Array:
    """Pallas identity projection: returns an array equal to x (shape (*, H))."""
    orig_shape = x.shape
    itemsize = jnp.dtype(x.dtype).itemsize
    rows, width, tile_r, grid = _choose_layout(orig_shape, itemsize)

    x2d = x.reshape(rows, width)

    out2d = pl.pallas_call(
        _identity_kernel,
        out_shape=jax.ShapeDtypeStruct((rows, width), x.dtype),
        grid_spec=pltpu.PrefetchScalarGridSpec(
            num_scalar_prefetch=0,
            grid=(grid,),
            in_specs=[pl.BlockSpec((tile_r, width), lambda i: (i, 0))],
            out_specs=pl.BlockSpec((tile_r, width), lambda i: (i, 0)),
        ),
        # Output is bit-identical to the input -> donate/alias the buffer so
        # traffic is at most one HBM read + one HBM write (XLA may elide even
        # that when the consumer allows in-place reuse).
        input_output_aliases={0: 0},
        compiler_params=pltpu.CompilerParams(
            dimension_semantics=("parallel",),
        ),
    )(x2d)

    return out2d.reshape(orig_shape)


if __name__ == "__main__":
    key = jax.random.PRNGKey(0)

    # IdentityProjection(dim=32) on a (*, H) input: (batch=2, seq=8, hidden=32).
    x = jax.random.normal(key, (2, 8, 32), dtype=jnp.float32)
    y = jax.block_until_ready(identity_projection(x))
    assert y.shape == x.shape and y.dtype == x.dtype
    assert bool(jnp.array_equal(y, x))

    # Exercise the tiled multi-block, sub-32-bit path as well (bf16).
    x2 = jax.random.normal(jax.random.PRNGKey(1), (8, 512, 384), dtype=jnp.bfloat16)
    y2 = jax.block_until_ready(identity_projection(x2))
    assert y2.shape == x2.shape and y2.dtype == x2.dtype
    assert bool(jnp.array_equal(y2, x2))

    # Odd feature dim (not a multiple of 128) -> full-width fallback path.
    x3 = jax.random.normal(jax.random.PRNGKey(2), (4, 16, 33), dtype=jnp.float32)
    y3 = jax.block_until_ready(identity_projection(x3))
    assert y3.shape == x3.shape and y3.dtype == x3.dtype
    assert bool(jnp.array_equal(y3, x3))

    print("KERNEL_OK")
</pallas_src>

<mosaic_0001>
module attributes {stable_mosaic.version = 11 : i64} {
  func.func @_identity_kernel(%arg0: i32, %arg1: memref<1x512xf32, #tpu.memory_space<vmem>>, %arg2: memref<1x512xf32, #tpu.memory_space<vmem>>) attributes {dimension_semantics = [#tpu.dimension_semantics<parallel>], iteration_bounds = array<i64: 1>, scalar_prefetch = 0 : i64, scratch_operands = 0 : i64, tpu.core_type = #tpu.core_type<tc>, window_params = [{transform_indices = @transform_0, window_bounds = array<i64: 1, 512>}, {transform_indices = @transform_1, window_bounds = array<i64: 1, 512>}]} {
    %c0 = arith.constant 0 : index
    %c0_0 = arith.constant 0 : index
    %0 = vector.load %arg1[%c0, %c0_0] : memref<1x512xf32, #tpu.memory_space<vmem>>, vector<1x512xf32>
    %c0_1 = arith.constant 0 : index
    %c0_2 = arith.constant 0 : index
    %1 = vector.load %arg2[%c0_1, %c0_2] : memref<1x512xf32, #tpu.memory_space<vmem>>, vector<1x512xf32>
    tpu.vector_store %arg2[%c0_1, %c0_2], %0 {strides = array<i32>} : memref<1x512xf32, #tpu.memory_space<vmem>>, vector<1x512xf32>,
    return
  }
  func.func @transform_0(%arg0: i32) -> (i32, i32) {
    %c0_i32 = arith.constant 0 : i32
    %c0_i32_0 = arith.constant 0 : i32
    return %arg0, %c0_i32 : i32, i32
  }
  func.func @transform_1(%arg0: i32) -> (i32, i32) {
    %c0_i32 = arith.constant 0 : i32
    %c0_i32_0 = arith.constant 0 : i32
    return %arg0, %c0_i32 : i32, i32
  }
}

</mosaic_0001>

<llo_original>
// kernel: tpu_custom_call.1
$region0: #{tpu_custom_call.1}
  #allocation0 [shape = 'u32[]', space=smem, size = 0x4, offset = 0x4, fixed_abs, tag = 'smem constant byte address 0x4 - core index']
  #allocation1 [shape = 'u32[72,128]{1,0:T(1,128)}', space=vmem, size = 0x9000, scoped, tag = 'internal scratch']
  %s0 = inlined_call_operand.hbm [shape: f32[1,512], index: 0, kind: input, shape index: {}, may-alias: {0,1}]
  %s1 = inlined_call_operand.hbm [shape: f32[1,512], index: 1, kind: output, shape index: {}, may-alias: {0,1}]
  %s2 = sld [smem:[#allocation0]]
  $region18: #{tpu_custom_call.1} parent=0
    _
  %s4 = ssub.s32 1, %s2
  %s5 = scalar_select 0, %s4, %s2
  $region1: #{tpu_custom_call.1} parent=0
    #allocation2 [shape = 'u8[2048]{0}', space=vmem, size = 0x800, scoped, tag = 'input window, operand 0, single buffered']
    #allocation3 [shape = 's32[1]{0}', space=sflag, size = 0x4, scoped, tag = 'scoped memory for tpu_custom_call.1']
    #allocation4 [shape = 's32[1]{0}', space=sflag, size = 0x4, scoped, tag = 'scoped memory for tpu_custom_call.1']
    #allocation5 [shape = 'u8[2048]{0}', space=vmem, size = 0x800, scoped, tag = 'output window, operand 0, single buffered']
    %6 = vsyncpa [#allocation3], 0
    %7 = vsyncpa [#allocation4], 0
    // Predicated region
    $region2: #{tpu_custom_call.1} parent=1 // pred_check
      _
    $region3: #{tpu_custom_call.1} parent=1 // pred_check_branch
      %9 = sbr.rel (0) target = $region5
    $region4: #{tpu_custom_call.1} parent=1 // pred_region
      %11 = vsyncadd [#allocation3], 0
      %s13 = sshll.u32 %s0, 4
      %s14 = int_to_ptr.hbm [resolvable:$true] %s13
      %s15 = sshll.u32 [#allocation2], 4
      %s16 = int_to_ptr.vmem [resolvable:$true] %s15
      %18 = dma.hbm_to_vmem [thread:$0]  %s14, 64, %s16, [#allocation3]
    $region5: #{tpu_custom_call.1} parent=1 // pred_fallthru
      _
    // Predicated region
    $region6: #{tpu_custom_call.1} parent=1 // pred_check
      _
    $region7: #{tpu_custom_call.1} parent=1 // pred_check_branch
      %20 = sbr.rel (0) target = $region9
    $region8: #{tpu_custom_call.1} parent=1 // pred_region
      %22 = dma.done [#allocation3], 64
    $region9: #{tpu_custom_call.1} parent=1 // pred_fallthru
      _
    %v23 = vld [vmem:[#allocation2] sm:$0xf]
    %v24 = vlaneseq
    %vm25 = vcmp.ge.s32.totalorder %v24, 0
    %vm26 = vcmp.lt.s32.totalorder %v24, 512
    %vm27 = vmand %vm25, %vm26
    %28 = vst.msk [vmem:[#allocation5] sm:$0xf] %vm27, %v23
    // Predicated region
    $region10: #{tpu_custom_call.1} parent=1 // pred_check
      _
    $region11: #{tpu_custom_call.1} parent=1 // pred_check_branch
      %30 = sbr.rel (0) target = $region13
    $region12: #{tpu_custom_call.1} parent=1 // pred_region
      %32 = vsyncadd [#allocation4], 0
      %s34 = sshll.u32 [#allocation5], 4
      %s35 = int_to_ptr.vmem [resolvable:$true] %s34
      %s36 = sshll.u32 %s1, 4
      %s37 = int_to_ptr.hbm [resolvable:$true] %s36
      %39 = dma.vmem_to_hbm [thread:$0]  %s35, 64, %s37, [#allocation4]
    $region13: #{tpu_custom_call.1} parent=1 // pred_fallthru
      _
    // Predicated region
    $region14: #{tpu_custom_call.1} parent=1 // pred_check
      _
    $region15: #{tpu_custom_call.1} parent=1 // pred_check_branch
      %41 = sbr.rel (0) target = $region17
    $region16: #{tpu_custom_call.1} parent=1 // pred_region
      %43 = dma.done [#allocation4], 64
    $region17: #{tpu_custom_call.1} parent=1 // pred_fallthru
      _
    %44 = vsyncpa [#allocation3], 1
    %45 = vsyncpa [#allocation4], 1

</llo_original>
